<compile_context>
chip_gen: v6e
topology: v6e:2x2x1
jax: 0.10.0
libtpu: 0.0.40
codegen_flags: <defaults>
</compile_context>

<pallas_src>
import jax
import jax.numpy as jnp
from jax.experimental import pallas as pl
from jax.experimental.pallas import tpu as pltpu


_LANES = 1024           # lane-dense width (multiple of 128)
_MAX_BLOCK_ROWS = 512   # 512 * 1024 * 4B = 2 MiB per f32 block
                        # -> 8 MiB with double-buffered in+out (fits all gens)


def _relu_kernel(x_ref, o_ref):
    x = x_ref[...]
    o_ref[...] = jnp.maximum(x, jnp.zeros_like(x)).astype(o_ref.dtype)


def _sublane_multiple(dtype) -> int:
    itemsize = jnp.dtype(dtype).itemsize
    return {4: 8, 2: 16, 1: 32}.get(itemsize, 8)


def _relu_pallas(x: jax.Array) -> jax.Array:
    """ReLU over an arbitrary-shaped array via a lane-dense Pallas kernel."""
    orig_shape = x.shape
    dtype = x.dtype

    flat = x.reshape(-1)                       # metadata-only for contiguous x
    t = flat.shape[0]

    # Tail-only pad so the flat buffer views as (rows, _LANES).  This is the
    # only case where an extra copy is paid; when numel % 1024 == 0 there is
    # no pad and no trim.
    pad = (-t) % _LANES
    if pad:
        flat = jnp.pad(flat, (0, pad))
    rows = flat.shape[0] // _LANES
    x2d = flat.reshape(rows, _LANES)

    sublane = _sublane_multiple(dtype)
    if rows <= _MAX_BLOCK_ROWS:
        # Single block covering the full row extent (full-dim block shapes are
        # exempt from the (8,128) divisibility rule).
        block_rows = rows
    else:
        block_rows = _MAX_BLOCK_ROWS           # multiple of 8 / 16 / 32
        assert block_rows % sublane == 0

    grid = (pl.cdiv(rows, block_rows),)        # ragged last block handled by Pallas

    out2d = pl.pallas_call(
        _relu_kernel,
        out_shape=jax.ShapeDtypeStruct((rows, _LANES), dtype),
        grid=grid,
        in_specs=[pl.BlockSpec((block_rows, _LANES), lambda i: (i, 0))],
        out_specs=pl.BlockSpec((block_rows, _LANES), lambda i: (i, 0)),
        compiler_params=pltpu.CompilerParams(
            dimension_semantics=("parallel",),   # shards across v7x's 2 TCs
        ),
    )(x2d)

    out = out2d.reshape(-1)
    if pad:
        out = out[:t]
    return out.reshape(orig_shape)


class EmbeddingAbstractPallas:
    """JAX/Pallas mirror of dwi_ml's EmbeddingAbstract."""

    def __init__(self, nb_features_in: int, activation: str = None, key: str = ''):
        self.nb_features_in = nb_features_in
        self.key = key
        self.activation = activation
        self.activation_layer = None
        if self.activation is not None:
            if self.activation.lower() == 'relu':
                self.activation_layer = _relu_pallas
            else:
                raise NotImplementedError(
                    'Activation function not recognized for embedding layer.')

    def apply_activation(self, x: jax.Array) -> jax.Array:
        if self.activation_layer is None:
            # Identity: no kernel launch, no HBM traffic.
            return x
        return self.activation_layer(x)

    def forward(self, inputs: jax.Array) -> jax.Array:
        # The reference forward() is abstract (raises NotImplementedError).
        # We run the module's only defined compute (the activation path) so
        # the kernel is exercised end-to-end.
        return self.apply_activation(inputs)

    __call__ = forward


if __name__ == "__main__":
    key = jax.random.PRNGKey(0)
    nb_features_in = 4

    # Small shape consistent with the module: N = batch*seq points, F features.
    batch, seq = 2, 8
    x_small = jax.random.normal(key, (batch * seq, nb_features_in), jnp.float32)

    # A second shape whose numel is a multiple of 1024 (no tail pad path).
    x_big = jax.random.normal(key, (2048, nb_features_in), jnp.float32)

    emb_relu = EmbeddingAbstractPallas(nb_features_in, activation='ReLu', key='emb')
    emb_id = EmbeddingAbstractPallas(nb_features_in, activation=None, key='emb')

    y_small = emb_relu(x_small)
    y_big = emb_relu(x_big)
    y_id = emb_id(x_small)
    jax.block_until_ready((y_small, y_big, y_id))

    # Correctness checks against plain JAX references.
    assert y_small.shape == x_small.shape and y_small.dtype == x_small.dtype
    assert y_big.shape == x_big.shape and y_big.dtype == x_big.dtype
    assert jnp.allclose(y_small, jnp.maximum(x_small, 0.0)), "ReLU mismatch (small)"
    assert jnp.allclose(y_big, jnp.maximum(x_big, 0.0)), "ReLU mismatch (big)"
    assert jnp.allclose(y_id, x_small), "Identity mismatch"

    print("KERNEL_OK")
</pallas_src>

<mosaic_0001>
module attributes {stable_mosaic.version = 11 : i64} {
  func.func @_relu_kernel(%arg0: i32, %arg1: memref<1x1024xf32, #tpu.memory_space<vmem>>, %arg2: memref<1x1024xf32, #tpu.memory_space<vmem>>) attributes {dimension_semantics = [#tpu.dimension_semantics<parallel>], iteration_bounds = array<i64: 1>, scalar_prefetch = 0 : i64, scratch_operands = 0 : i64, tpu.core_type = #tpu.core_type<tc>, window_params = [{transform_indices = @transform_0, window_bounds = array<i64: 1, 1024>}, {transform_indices = @transform_1, window_bounds = array<i64: 1, 1024>}]} {
    %c0 = arith.constant 0 : index
    %c0_0 = arith.constant 0 : index
    %0 = vector.load %arg1[%c0, %c0_0] : memref<1x1024xf32, #tpu.memory_space<vmem>>, vector<1x1024xf32>
    %cst = arith.constant 0.000000e+00 : f32
    %1 = vector.broadcast %cst : f32 to vector<1x1024xf32>
    %2 = arith.maximumf %0, %1 : vector<1x1024xf32>
    %c0_1 = arith.constant 0 : index
    %c0_2 = arith.constant 0 : index
    %3 = vector.load %arg2[%c0_1, %c0_2] : memref<1x1024xf32, #tpu.memory_space<vmem>>, vector<1x1024xf32>
    tpu.vector_store %arg2[%c0_1, %c0_2], %2 {strides = array<i32>} : memref<1x1024xf32, #tpu.memory_space<vmem>>, vector<1x1024xf32>,
    return
  }
  func.func @transform_0(%arg0: i32) -> (i32, i32) {
    %c0_i32 = arith.constant 0 : i32
    %c0_i32_0 = arith.constant 0 : i32
    return %arg0, %c0_i32 : i32, i32
  }
  func.func @transform_1(%arg0: i32) -> (i32, i32) {
    %c0_i32 = arith.constant 0 : i32
    %c0_i32_0 = arith.constant 0 : i32
    return %arg0, %c0_i32 : i32, i32
  }
}

</mosaic_0001>

<llo_original>
// kernel: tpu_custom_call.1
$region0: #{tpu_custom_call.1}
  #allocation0 [shape = 'u32[]', space=smem, size = 0x4, offset = 0x4, fixed_abs, tag = 'smem constant byte address 0x4 - core index']
  #allocation1 [shape = 'u32[144,128]{1,0:T(1,128)}', space=vmem, size = 0x12000, scoped, tag = 'internal scratch']
  %s0 = inlined_call_operand.hbm [shape: f32[1,1024], index: 0, kind: input, shape index: {}]
  %s1 = inlined_call_operand.hbm [shape: f32[1,1024], index: 1, kind: output, shape index: {}]
  %s2 = sld [smem:[#allocation0]]
  $region18: #{tpu_custom_call.1} parent=0
    _
  %s4 = ssub.s32 1, %s2
  %s5 = scalar_select 0, %s4, %s2
  $region1: #{tpu_custom_call.1} parent=0
    #allocation2 [shape = 'u8[4096]{0}', space=vmem, size = 0x1000, scoped, tag = 'input window, operand 0, single buffered']
    #allocation3 [shape = 's32[1]{0}', space=sflag, size = 0x4, scoped, tag = 'scoped memory for tpu_custom_call.1']
    #allocation4 [shape = 's32[1]{0}', space=sflag, size = 0x4, scoped, tag = 'scoped memory for tpu_custom_call.1']
    #allocation5 [shape = 'u8[4096]{0}', space=vmem, size = 0x1000, scoped, tag = 'output window, operand 0, single buffered']
    %6 = vsyncpa [#allocation3], 0
    %7 = vsyncpa [#allocation4], 0
    // Predicated region
    $region2: #{tpu_custom_call.1} parent=1 // pred_check
      _
    $region3: #{tpu_custom_call.1} parent=1 // pred_check_branch
      %9 = sbr.rel (0) target = $region5
    $region4: #{tpu_custom_call.1} parent=1 // pred_region
      %s11 = ssub.s32 128, 128
      %12 = vsyncadd [#allocation3], %s11
      %s14 = sshll.u32 [#allocation2], 4
      %s15 = int_to_ptr.vmem [resolvable:$true] %s14
      %17 = dma.hbm_to_vmem [thread:$0]  %s0, 128, %s15, [#allocation3]
    $region5: #{tpu_custom_call.1} parent=1 // pred_fallthru
      _
    // Predicated region
    $region6: #{tpu_custom_call.1} parent=1 // pred_check
      _
    $region7: #{tpu_custom_call.1} parent=1 // pred_check_branch
      %19 = sbr.rel (0) target = $region9
    $region8: #{tpu_custom_call.1} parent=1 // pred_region
      %20 = dma.done [#allocation3], 128
    $region9: #{tpu_custom_call.1} parent=1 // pred_fallthru
      _
    %v21 = vld [vmem:[#allocation2] sm:$0xff]
    %v22 = vmax.f32 %v21, 0.0
    %23 = vst [vmem:[#allocation5] sm:$0xff] %v22
    // Predicated region
    $region10: #{tpu_custom_call.1} parent=1 // pred_check
      _
    $region11: #{tpu_custom_call.1} parent=1 // pred_check_branch
      %25 = sbr.rel (0) target = $region13
    $region12: #{tpu_custom_call.1} parent=1 // pred_region
      %s27 = ssub.s32 128, 128
      %28 = vsyncadd [#allocation4], %s27
      %s30 = sshll.u32 [#allocation5], 4
      %s31 = int_to_ptr.vmem [resolvable:$true] %s30
      %33 = dma.vmem_to_hbm [thread:$0]  %s31, 128, %s1, [#allocation4]
    $region13: #{tpu_custom_call.1} parent=1 // pred_fallthru
      _
    // Predicated region
    $region14: #{tpu_custom_call.1} parent=1 // pred_check
      _
    $region15: #{tpu_custom_call.1} parent=1 // pred_check_branch
      %35 = sbr.rel (0) target = $region17
    $region16: #{tpu_custom_call.1} parent=1 // pred_region
      %36 = dma.done [#allocation4], 128
    $region17: #{tpu_custom_call.1} parent=1 // pred_fallthru
      _
    %37 = vsyncpa [#allocation3], 1
    %38 = vsyncpa [#allocation4], 1

</llo_original>
